<compile_context>
chip_gen: v6e
topology: v6e:2x2x1
jax: 0.10.0
libtpu: 0.0.40
codegen_flags: <defaults>
</compile_context>

<pallas_src>
import jax
import jax.numpy as jnp
from jax import lax
from jax.experimental import pallas as pl
from jax.experimental.pallas import tpu as pltpu

_SUBLANE = 8
_LANE = 128
# Conservative per-call VMEM budget / scoped limit: fits v7x's 64 MiB physical
# VMEM with headroom and sits well under v5e/v6e's 128 MiB.
_VMEM_TILE_BUDGET = 40 * 1024 * 1024
_VMEM_LIMIT_BYTES = 48 * 1024 * 1024


def _round_up(x, m):
    return ((x + m - 1) // m) * m


def _fused_blocks_kernel(x_ref, w_ref, b_ref, o_ref):
    """Chain one channels-first activation tile through all (folded) blocks.

    x_ref: [Cp, TILE_N]     activation tile (channels on sublanes, spatial on lanes)
    w_ref: [depth, Cp, Cp]  folded, pre-transposed weights (Wf+Wg)^T, VMEM-resident
    b_ref: [depth, Cp, 1]   folded biases (bf+bg), f32, VMEM-resident
    o_ref: [Cp, TILE_N]
    """
    depth = w_ref.shape[0]
    x0 = x_ref[...].astype(jnp.float32)

    def body(d, acc):
        w = w_ref[d]                                   # [Cp, Cp]
        rhs = acc if w.dtype == jnp.float32 else acc.astype(w.dtype)
        # x <- (Wf_d + Wg_d)^T @ x + (bf_d + bg_d); f32 accumulation on the
        # MXU, carried activation and bias epilogue stay f32.
        return jnp.dot(w, rhs, preferred_element_type=jnp.float32) + b_ref[d]

    # Blocks are serially dependent -> cap the unroll (no cross-block ILP).
    y = lax.fori_loop(0, depth, body, x0, unroll=min(depth, 4))
    o_ref[...] = y.astype(o_ref.dtype)


def sequential_forward(x_nchw, blocks, *, tile_n=2048, weights_dtype=None):
    """Sequential.forward: for (f, g) in blocks: x = f(x) + g(x).

    x_nchw: [B, C, H, W] (PyTorch NCHW convention)
    blocks: list of ((Wf, bf), (Wg, bg)) parameter tuples, Wf/Wg: [C, C], b: [C],
            with f(x) = x @ Wf + bf applied per pixel (channels-last convention).
    """
    B, C, H, W = x_nchw.shape
    depth = len(blocks)
    if depth == 0:
        return x_nchw
    dtype = x_nchw.dtype
    x_itemsize = jnp.dtype(dtype).itemsize

    # (1) Fold f(x)+g(x) == x @ (Wf+Wg) + (bf+bg); pre-transpose for the
    #     channels-first application y = (Wf+Wg)^T @ x + b.
    w_stack = jnp.stack([(wf + wg).T for (wf, _), (wg, _) in blocks])               # [depth, C, C]
    if weights_dtype is not None:
        w_stack = w_stack.astype(weights_dtype)       # opt-in bf16 MXU feed (v6e/v7x)
    b_stack = jnp.stack([(bf + bg).reshape(C, 1) for (_, bf), (_, bg) in blocks])   # [depth, C, 1]
    b_stack = b_stack.astype(jnp.float32)
    w_itemsize = jnp.dtype(w_stack.dtype).itemsize

    # (2) Channels-first layout: NCHW -> [B, C, H*W] is a free reshape (no
    #     transpose, no extra HBM pass).  Channels pad only to the sublane
    #     granule (8); spatial pads to the lane granule (128).
    HW = H * W
    x3 = x_nchw.reshape(B, C, HW)
    Cp = _round_up(C, _SUBLANE)

    # (3) VMEM budget.  The weight/bias BlockSpecs are grid-invariant (fetched
    #     once by the pipeline) but still occupy a 2-slot buffer -> count x2.
    per_block_w_bytes = 2 * (Cp * Cp * w_itemsize + Cp * 4)
    blocks_per_call = max(1, min(depth, int((_VMEM_TILE_BUDGET // 2) // per_block_w_bytes)))
    weight_bytes = blocks_per_call * per_block_w_bytes
    # TODO(synk): if a single [Cp,Cp] weight alone blows the budget, stream the
    # per-block weights with a manual make_async_copy double buffer instead.

    def _tile_bytes(tn):
        # double-buffered in + out tiles, plus f32 working copy + dot result.
        return 2 * 2 * Cp * tn * x_itemsize + 2 * Cp * tn * 4

    full_n = _round_up(HW, _LANE)
    tn = min(_round_up(max(tile_n, _LANE), _LANE), full_n)
    if tn < full_n:
        # Balance the tile count so the last tile is not mostly padding.
        n_tiles = -(-HW // tn)
        tn = min(_round_up(-(-HW // n_tiles), _LANE), full_n)
    while tn > _LANE and weight_bytes + _tile_bytes(tn) > _VMEM_TILE_BUDGET:
        tn = max(_LANE, _round_up(tn // 2, _LANE))

    Np = _round_up(HW, tn)
    pad_c, pad_n = Cp - C, Np - HW
    if pad_c or pad_n:
        # Zero padding is exact: zero weight rows/cols + zero bias keep padded
        # channels identically zero; padded spatial columns are sliced off.
        x3 = jnp.pad(x3, ((0, 0), (0, pad_c), (0, pad_n)))
    if pad_c:
        w_stack = jnp.pad(w_stack, ((0, 0), (0, pad_c), (0, pad_c)))
        b_stack = jnp.pad(b_stack, ((0, 0), (0, pad_c), (0, 0)))

    grid = (B, Np // tn)

    def _run_chunk(x_in, w_chunk, b_chunk):
        d = w_chunk.shape[0]
        cost = pl.CostEstimate(
            flops=2 * d * B * Np * Cp * Cp,
            transcendentals=0,
            bytes_accessed=2 * B * Cp * Np * x_itemsize
            + d * (Cp * Cp * w_itemsize + Cp * 4),
        )
        return pl.pallas_call(
            _fused_blocks_kernel,
            out_shape=jax.ShapeDtypeStruct((B, Cp, Np), dtype),
            grid=grid,
            in_specs=[
                pl.BlockSpec((None, Cp, tn), lambda b, n: (b, 0, n)),   # pipelined activation tile
                pl.BlockSpec((d, Cp, Cp), lambda b, n: (0, 0, 0)),      # grid-invariant folded weights
                pl.BlockSpec((d, Cp, 1), lambda b, n: (0, 0, 0)),       # grid-invariant folded biases
            ],
            out_specs=pl.BlockSpec((None, Cp, tn), lambda b, n: (b, 0, n)),
            compiler_params=pltpu.CompilerParams(
                # (batch, lane-tile) are independent -> megacore sharding.
                dimension_semantics=("parallel", "parallel"),
                vmem_limit_bytes=_VMEM_LIMIT_BYTES,
            ),
            cost_estimate=cost,
        )(x_in, w_chunk, b_chunk)

    # Normally one fused call over all blocks; chunk the depth only when the
    # full weight stack cannot be kept VMEM-resident.
    out3 = x3
    for start in range(0, depth, blocks_per_call):
        stop = min(start + blocks_per_call, depth)
        out3 = _run_chunk(out3, w_stack[start:stop], b_stack[start:stop])

    if pad_c or pad_n:
        out3 = out3[:, :C, :HW]
    return out3.reshape(B, C, H, W)


def _reference_forward(x_nchw, blocks):
    B, C, H, W = x_nchw.shape
    x = jnp.transpose(x_nchw, (0, 2, 3, 1)).reshape(B * H * W, C)
    for (wf, bf), (wg, bg) in blocks:
        x = (x @ wf + bf) + (x @ wg + bg)
    return jnp.transpose(x.reshape(B, H, W, C), (0, 3, 1, 2))


if __name__ == "__main__":
    key = jax.random.PRNGKey(0)
    B, C, H, W = 2, 4, 16, 16
    depth = 3  # number of (f, g) blocks in the Sequential container

    keys = jax.random.split(key, 1 + 4 * depth)
    x = jax.random.normal(keys[0], (B, C, H, W), dtype=jnp.float32)

    blocks = []
    for d in range(depth):
        kwf, kbf, kwg, kbg = keys[1 + 4 * d: 1 + 4 * (d + 1)]
        wf = jax.random.normal(kwf, (C, C), dtype=jnp.float32) * 0.1
        bf = jax.random.normal(kbf, (C,), dtype=jnp.float32) * 0.1
        wg = jax.random.normal(kwg, (C, C), dtype=jnp.float32) * 0.1
        bg = jax.random.normal(kbg, (C,), dtype=jnp.float32) * 0.1
        blocks.append(((wf, bf), (wg, bg)))

    out = sequential_forward(x, blocks)
    out = jax.block_until_ready(out)

    ref = _reference_forward(x, blocks)
    assert out.shape == (B, C, H, W)
    # Folding Wf+Wg (single f32 accumulation) changes rounding slightly vs.
    # summing two matmuls; well within tolerance.
    assert jnp.allclose(out, ref, atol=1e-5, rtol=1e-5)

    print("KERNEL_OK")
</pallas_src>

<mosaic_0001>
module attributes {stable_mosaic.version = 11 : i64} {
  func.func @_fused_blocks_kernel(%arg0: i32, %arg1: i32, %arg2: memref<1x8x256xf32, #tpu.memory_space<vmem>>, %arg3: memref<3x8x8xf32, #tpu.memory_space<vmem>>, %arg4: memref<3x8x1xf32, #tpu.memory_space<vmem>>, %arg5: memref<1x8x256xf32, #tpu.memory_space<vmem>>) attributes {dimension_semantics = [#tpu.dimension_semantics<parallel>, #tpu.dimension_semantics<parallel>], iteration_bounds = array<i64: 2, 1>, scalar_prefetch = 0 : i64, scratch_operands = 0 : i64, tpu.core_type = #tpu.core_type<tc>, window_params = [{transform_indices = @transform_0, window_bounds = array<i64: 1, 8, 256>}, {pipeline_mode = #tpu.pipeline_mode<synchronous>, transform_indices = @transform_1, window_bounds = array<i64: 3, 8, 8>}, {pipeline_mode = #tpu.pipeline_mode<synchronous>, transform_indices = @transform_2, window_bounds = array<i64: 3, 8, 1>}, {transform_indices = @transform_3, window_bounds = array<i64: 1, 8, 256>}]} {
    %c0 = arith.constant 0 : index
    %c0_0 = arith.constant 0 : index
    %c0_1 = arith.constant 0 : index
    %0 = vector.load %arg2[%c0, %c0_0, %c0_1] : memref<1x8x256xf32, #tpu.memory_space<vmem>>, vector<1x8x256xf32>
    %1 = vector.shape_cast %0 : vector<1x8x256xf32> to vector<8x256xf32>
    %c0_i32 = arith.constant 0 : i32
    %2 = arith.index_cast %c0_i32 : i32 to index
    %c0_2 = arith.constant 0 : index
    %c0_3 = arith.constant 0 : index
    %3 = vector.load %arg3[%2, %c0_2, %c0_3] : memref<3x8x8xf32, #tpu.memory_space<vmem>>, vector<1x8x8xf32>
    %4 = vector.shape_cast %3 : vector<1x8x8xf32> to vector<8x8xf32>
    %cst = arith.constant dense<0.000000e+00> : vector<8x256xf32>
    %5 = tpu.matmul %4, %1, %cst {dimension_numbers = #tpu.dot_dimension_numbers<[1], [0], [0], [1], [0, 0, 1, 1], [], []>} : vector<8x8xf32>, vector<8x256xf32>, vector<8x256xf32> -> vector<8x256xf32>
    %6 = arith.index_cast %c0_i32 : i32 to index
    %c0_4 = arith.constant 0 : index
    %c0_5 = arith.constant 0 : index
    %7 = vector.load %arg4[%6, %c0_4, %c0_5] : memref<3x8x1xf32, #tpu.memory_space<vmem>>, vector<1x8x1xf32>
    %8 = vector.shape_cast %7 : vector<1x8x1xf32> to vector<8x1xf32>
    %9 = vector.broadcast %8 : vector<8x1xf32> to vector<8x256xf32>
    %10 = arith.addf %5, %9 : vector<8x256xf32>
    %c1_i32 = arith.constant 1 : i32
    %11 = arith.index_cast %c1_i32 : i32 to index
    %c0_6 = arith.constant 0 : index
    %c0_7 = arith.constant 0 : index
    %12 = vector.load %arg3[%11, %c0_6, %c0_7] : memref<3x8x8xf32, #tpu.memory_space<vmem>>, vector<1x8x8xf32>
    %13 = vector.shape_cast %12 : vector<1x8x8xf32> to vector<8x8xf32>
    %cst_8 = arith.constant dense<0.000000e+00> : vector<8x256xf32>
    %14 = tpu.matmul %13, %10, %cst_8 {dimension_numbers = #tpu.dot_dimension_numbers<[1], [0], [0], [1], [0, 0, 1, 1], [], []>} : vector<8x8xf32>, vector<8x256xf32>, vector<8x256xf32> -> vector<8x256xf32>
    %15 = arith.index_cast %c1_i32 : i32 to index
    %c0_9 = arith.constant 0 : index
    %c0_10 = arith.constant 0 : index
    %16 = vector.load %arg4[%15, %c0_9, %c0_10] : memref<3x8x1xf32, #tpu.memory_space<vmem>>, vector<1x8x1xf32>
    %17 = vector.shape_cast %16 : vector<1x8x1xf32> to vector<8x1xf32>
    %18 = vector.broadcast %17 : vector<8x1xf32> to vector<8x256xf32>
    %19 = arith.addf %14, %18 : vector<8x256xf32>
    %c2_i32 = arith.constant 2 : i32
    %20 = arith.index_cast %c2_i32 : i32 to index
    %c0_11 = arith.constant 0 : index
    %c0_12 = arith.constant 0 : index
    %21 = vector.load %arg3[%20, %c0_11, %c0_12] : memref<3x8x8xf32, #tpu.memory_space<vmem>>, vector<1x8x8xf32>
    %22 = vector.shape_cast %21 : vector<1x8x8xf32> to vector<8x8xf32>
    %cst_13 = arith.constant dense<0.000000e+00> : vector<8x256xf32>
    %23 = tpu.matmul %22, %19, %cst_13 {dimension_numbers = #tpu.dot_dimension_numbers<[1], [0], [0], [1], [0, 0, 1, 1], [], []>} : vector<8x8xf32>, vector<8x256xf32>, vector<8x256xf32> -> vector<8x256xf32>
    %24 = arith.index_cast %c2_i32 : i32 to index
    %c0_14 = arith.constant 0 : index
    %c0_15 = arith.constant 0 : index
    %25 = vector.load %arg4[%24, %c0_14, %c0_15] : memref<3x8x1xf32, #tpu.memory_space<vmem>>, vector<1x8x1xf32>
    %26 = vector.shape_cast %25 : vector<1x8x1xf32> to vector<8x1xf32>
    %27 = vector.broadcast %26 : vector<8x1xf32> to vector<8x256xf32>
    %28 = arith.addf %23, %27 : vector<8x256xf32>
    %c3_i32 = arith.constant 3 : i32
    %c0_16 = arith.constant 0 : index
    %c0_17 = arith.constant 0 : index
    %c0_18 = arith.constant 0 : index
    %29 = vector.load %arg5[%c0_16, %c0_17, %c0_18] : memref<1x8x256xf32, #tpu.memory_space<vmem>>, vector<1x8x256xf32>
    %30 = vector.shape_cast %29 : vector<1x8x256xf32> to vector<8x256xf32>
    %31 = vector.shape_cast %28 : vector<8x256xf32> to vector<1x8x256xf32>
    tpu.vector_store %arg5[%c0_16, %c0_17, %c0_18], %31 {strides = array<i32>} : memref<1x8x256xf32, #tpu.memory_space<vmem>>, vector<1x8x256xf32>,
    return
  }
  func.func @transform_0(%arg0: i32, %arg1: i32) -> (i32, i32, i32) {
    %c0_i32 = arith.constant 0 : i32
    %c0_i32_0 = arith.constant 0 : i32
    return %arg0, %c0_i32, %arg1 : i32, i32, i32
  }
  func.func @transform_1(%arg0: i32, %arg1: i32) -> (i32, i32, i32) {
    %c0_i32 = arith.constant 0 : i32
    %c0_i32_0 = arith.constant 0 : i32
    %c0_i32_1 = arith.constant 0 : i32
    %c0_i32_2 = arith.constant 0 : i32
    return %c0_i32, %c0_i32_0, %c0_i32_1 : i32, i32, i32
  }
  func.func @transform_2(%arg0: i32, %arg1: i32) -> (i32, i32, i32) {
    %c0_i32 = arith.constant 0 : i32
    %c0_i32_0 = arith.constant 0 : i32
    %c0_i32_1 = arith.constant 0 : i32
    %c0_i32_2 = arith.constant 0 : i32
    return %c0_i32, %c0_i32_0, %c0_i32_1 : i32, i32, i32
  }
  func.func @transform_3(%arg0: i32, %arg1: i32) -> (i32, i32, i32) {
    %c0_i32 = arith.constant 0 : i32
    %c0_i32_0 = arith.constant 0 : i32
    return %arg0, %c0_i32, %arg1 : i32, i32, i32
  }
}

</mosaic_0001>

<llo_original>
// kernel: tpu_custom_call.1
$region0: #{tpu_custom_call.1}
  #allocation0 [shape = 'u32[]', space=smem, size = 0x4, offset = 0x4, fixed_abs, tag = 'smem constant byte address 0x4 - core index']
  #allocation1 [shape = 'u32[144,128]{1,0:T(1,128)}', space=vmem, size = 0x12000, scoped, tag = 'internal scratch']
  %s0 = inlined_call_operand.hbm [shape: f32[2,8,256], index: 0, kind: input, shape index: {}]
  %s1 = inlined_call_operand.vmem [shape: f32[3,8,8], index: 1, kind: input, shape index: {}]
  %s2 = inlined_call_operand.vmem [shape: f32[3,8,1], index: 2, kind: input, shape index: {}]
  %s3 = inlined_call_operand.hbm [shape: f32[2,8,256], index: 3, kind: output, shape index: {}]
  %s4 = sld [smem:[#allocation0]]
  $region49: #{tpu_custom_call.1} parent=0
    _
  %s6 = ssub.s32 1, %s4
  %s7 = scalar_select 0, %s6, %s4
  $region1: #{tpu_custom_call.1} parent=0
    #allocation2 [shape = 'u8[16384]{0}', space=vmem, size = 0x4000, scoped, tag = 'input window, operand 0']
    #allocation3 [shape = 's32[2]{0}', space=sflag, size = 0x8, scoped, tag = 'scoped memory for tpu_custom_call.1']
    #allocation4 [shape = 's32[2]{0}', space=sflag, size = 0x8, scoped, tag = 'scoped memory for tpu_custom_call.1']
    #allocation5 [shape = 'u8[16384]{0}', space=vmem, size = 0x4000, scoped, tag = 'output window, operand 0']
    %8 = vsyncpa [#allocation3], 0
    %s9 = scalar_lea.sflag [#allocation3], 1
    %10 = vsyncpa %s9, 0
    %11 = vsyncpa [#allocation4], 0
    %s12 = scalar_lea.sflag [#allocation4], 1
    %13 = vsyncpa %s12, 0
    loop: start=0, step=1, limit=4
    $region2: #{tpu_custom_call.1} parent=1 // loop_pre_header
      _
    $region3: #{tpu_custom_call.1} parent=1 // loop_header
      %s15 = sphi 0, %s19
      %p16 = scmp.ge.s32.totalorder %s15, 4
      %s22 = sphi 0, %s34
      %s23 = sphi 0, %s30
      %s24 = sphi 0, %s22
      %s25 = sphi 0, %s23
      %s26 = sphi 0, %s24
      %s27 = sphi 0, %s25
      %s39 = sphi 0, %s41
      %s42 = sphi 0, %s39
      %s43 = sphi 0, %s42
      %s59 = sphi 0, %s43
      %s63 = sphi 0, %s63
      %s65 = sphi 0, %s63
      %s66 = sphi 0, %s65
      %s80 = sphi 0, %s66
      %s84 = sphi 0, %s84
      %s86 = sphi 0, %s84
      %s87 = sphi 0, %s86
      %s101 = sphi 0, %s87
      %s109 = sphi 0, %s111
      %s112 = sphi 0, %s109
      %s113 = sphi 0, %s112
      %s129 = sphi 0, %s113
    $region4: #{tpu_custom_call.1} parent=1 // loop_header_branch
      %18 = sbr.rel (%p16) target = $region8
    $region5: #{tpu_custom_call.1} parent=1 // loop_body
      %s20 = ssub.s32 %s15, 1
      %s21 = ssub.s32 %s15, 2
      %s28 = sadd.s32 1, %s23
      %p29 = scmp.ge.s32.totalorder %s28, 1
      %s30 = scalar_select %p29, 0, %s28
      %s31 = sadd.s32 1, %s22
      %s32 = scalar_select %p29, %s31, %s22
      %p33 = scmp.ge.s32.totalorder %s32, 2
      %s34 = scalar_select %p33, 0, %s32
      %s35 = ssub.s32 %s22, %s34
      %s36 = ssub.s32 %s23, %s30
      %s37 = sor.u32 %s35, %s36
      %p38 = scmp.eq.s32.totalorder %s37, 0
      %s40 = sadd.s32 %s39, 1
      %s41 = scalar_select %p38, %s39, %s40
      %p44 = pneg %p38
      %p45 = scmp.eq.s32.totalorder %s15, 1
      %p46 = por %p44, %p45
      %p47 = scmp.ne.s32.totalorder %s39, %s42
      %p48 = scmp.eq.s32.totalorder %s15, 0
      %p49 = por %p47, %p48
      %p50 = scmp.ne.s32.totalorder %s39, %s42
      %p51 = scmp.eq.s32.totalorder %s20, 1
      %p52 = por %p50, %p51
      %p53 = scmp.ne.s32.totalorder %s42, %s43
      %p54 = scmp.eq.s32.totalorder %s20, 0
      %p55 = por %p53, %p54
      %p56 = scmp.ne.s32.totalorder %s42, %s43
      %p57 = scmp.eq.s32.totalorder %s21, 1
      %p58 = por %p56, %p57
      %p60 = scmp.ne.s32.totalorder %s43, %s59
      %p61 = scmp.eq.s32.totalorder %s21, 0
      %p62 = por %p60, %p61
      %s64 = sadd.s32 %s63, 1
      %p67 = scmp.eq.s32.totalorder %s15, 1
      %p68 = scmp.ne.s32.totalorder %s63, %s65
      %p69 = scmp.eq.s32.totalorder %s15, 0
      %p70 = por %p68, %p69
      %p71 = scmp.ne.s32.totalorder %s63, %s65
      %p72 = scmp.eq.s32.totalorder %s20, 1
      %p73 = por %p71, %p72
      %p74 = scmp.ne.s32.totalorder %s65, %s66
      %p75 = scmp.eq.s32.totalorder %s20, 0
      %p76 = por %p74, %p75
      %p77 = scmp.ne.s32.totalorder %s65, %s66
      %p78 = scmp.eq.s32.totalorder %s21, 1
      %p79 = por %p77, %p78
      %p81 = scmp.ne.s32.totalorder %s66, %s80
      %p82 = scmp.eq.s32.totalorder %s21, 0
      %p83 = por %p81, %p82
      %s85 = sadd.s32 %s84, 1
      %p88 = scmp.eq.s32.totalorder %s15, 1
      %p89 = scmp.ne.s32.totalorder %s84, %s86
      %p90 = scmp.eq.s32.totalorder %s15, 0
      %p91 = por %p89, %p90
      %p92 = scmp.ne.s32.totalorder %s84, %s86
      %p93 = scmp.eq.s32.totalorder %s20, 1
      %p94 = por %p92, %p93
      %p95 = scmp.ne.s32.totalorder %s86, %s87
      %p96 = scmp.eq.s32.totalorder %s20, 0
      %p97 = por %p95, %p96
      %p98 = scmp.ne.s32.totalorder %s86, %s87
      %p99 = scmp.eq.s32.totalorder %s21, 1
      %p100 = por %p98, %p99
      %p102 = scmp.ne.s32.totalorder %s87, %s101
      %p103 = scmp.eq.s32.totalorder %s21, 0
      %p104 = por %p102, %p103
      %s105 = ssub.s32 %s22, %s34
      %s106 = ssub.s32 %s23, %s30
      %s107 = sor.u32 %s105, %s106
      %p108 = scmp.eq.s32.totalorder %s107, 0
      %s110 = sadd.s32 %s109, 1
      %s111 = scalar_select %p108, %s109, %s110
      %p114 = pneg %p108
      %p115 = scmp.eq.s32.totalorder %s15, 1
      %p116 = por %p114, %p115
      %p117 = scmp.ne.s32.totalorder %s109, %s112
      %p118 = scmp.eq.s32.totalorder %s15, 0
      %p119 = por %p117, %p118
      %p120 = scmp.ne.s32.totalorder %s109, %s112
      %p121 = scmp.eq.s32.totalorder %s20, 1
      %p122 = por %p120, %p121
      %p123 = scmp.ne.s32.totalorder %s112, %s113
      %p124 = scmp.eq.s32.totalorder %s20, 0
      %p125 = por %p123, %p124
      %p126 = scmp.ne.s32.totalorder %s112, %s113
      %p127 = scmp.eq.s32.totalorder %s21, 1
      %p128 = por %p126, %p127
      %p130 = scmp.ne.s32.totalorder %s113, %s129
      %p131 = scmp.eq.s32.totalorder %s21, 0
      %p132 = por %p130, %p131
      %p133 = scmp.le.s32.totalorder 1, %s15
      %p134 = scmp.lt.s32.totalorder %s15, 3
      %p135 = pnand %p133, %p134
      %p136 = pneg %p135
      // Predicated region
      $region9: #{tpu_custom_call.1} parent=5 // pred_check
        _
      $region10: #{tpu_custom_call.1} parent=5 // pred_check_branch
        %138 = sbr.rel (%p135) target = $region12
      $region11: #{tpu_custom_call.1} parent=5 // pred_region
        %s139 = ssub.s32 %s15, 1
        // Predicated region
        $region13: #{tpu_custom_call.1} parent=11 // pred_check
          %p140 = pneg %p76
        $region14: #{tpu_custom_call.1} parent=11 // pred_check_branch
          %142 = sbr.rel (%p140) target = $region16
        $region15: #{tpu_custom_call.1} parent=11 // pred_region
          _
        $region16: #{tpu_custom_call.1} parent=11 // pred_fallthru
          _
        // Predicated region
        $region17: #{tpu_custom_call.1} parent=11 // pred_check
          %p143 = pneg %p97
        $region18: #{tpu_custom_call.1} parent=11 // pred_check_branch
          %145 = sbr.rel (%p143) target = $region20
        $region19: #{tpu_custom_call.1} parent=11 // pred_region
          _
        $region20: #{tpu_custom_call.1} parent=11 // pred_fallthru
          _
      $region12: #{tpu_custom_call.1} parent=5 // pred_fallthru
        _
      %p146 = scmp.lt.s32.totalorder %s15, 2
      // Predicated region
      $region21: #{tpu_custom_call.1} parent=5 // pred_check
        %p147 = pneg %p146
      $region22: #{tpu_custom_call.1} parent=5 // pred_check_branch
        %149 = sbr.rel (%p147) target = $region24
      $region23: #{tpu_custom_call.1} parent=5 // pred_region
        // Predicated region
        $region25: #{tpu_custom_call.1} parent=23 // pred_check
          %p150 = pneg %p49
        $region26: #{tpu_custom_call.1} parent=23 // pred_check_branch
          %152 = sbr.rel (%p150) target = $region28
        $region27: #{tpu_custom_call.1} parent=23 // pred_region
          %s153 = sand.u32 %s39, 1
          %s154 = scalar_lea.sflag [#allocation3], %s153
          %s155 = sand.u32 %s39, 1
          %s156 = smul.addr %s155, 16
          %s157 = scalar_lea.vmem [#allocation2], %s156
          %s158 = smul.u32 2, %s23
          %s160 = ssub.s32 256, 256
          %161 = vsyncadd %s154, %s160
          %s162 = smul.addr %s22, 2
          %s163 = sadd.s32 %s158, %s162
          %s164 = smul.addr %s163, 128
          %s165 = scalar_lea.hbm %s0, %s164
          %s167 = sshll.u32 %s157, 4
          %s168 = int_to_ptr.vmem [resolvable:$true] %s167
          %170 = dma.hbm_to_vmem [thread:$0]  %s165, 256, %s168, %s154
        $region28: #{tpu_custom_call.1} parent=23 // pred_fallthru
          _
      $region24: #{tpu_custom_call.1} parent=5 // pred_fallthru
        _
      %p171 = scmp.le.s32.totalorder 1, %s15
      %p172 = scmp.lt.s32.totalorder %s15, 3
      %p173 = pnand %p171, %p172
      %p174 = pneg %p173
      // Predicated region
      $region29: #{tpu_custom_call.1} parent=5 // pred_check
        _
      $region30: #{tpu_custom_call.1} parent=5 // pred_check_branch
        %176 = sbr.rel (%p173) target = $region32
      $region31: #{tpu_custom_call.1} parent=5 // pred_region
        %s177 = ssub.s32 %s15, 1
        %s178 = sand.u32 %s42, 1
        %s179 = scalar_lea.sflag [#allocation3], %s178
        %s180 = sand.u32 %s42, 1
        %s181 = smul.addr %s180, 16
        %s182 = scalar_lea.vmem [#allocation2], %s181
        // Predicated region
        $region33: #{tpu_custom_call.1} parent=31 // pred_check
          %p183 = pneg %p55
        $region34: #{tpu_custom_call.1} parent=31 // pred_check_branch
          %185 = sbr.rel (%p183) target = $region36
        $region35: #{tpu_custom_call.1} parent=31 // pred_region
          %186 = dma.done %s179, 256
        $region36: #{tpu_custom_call.1} parent=31 // pred_fallthru
          _
        %s187 = sand.u32 %s42, 1
        %s188 = scalar_lea.sflag [#allocation3], %s187
        %s189 = sand.u32 %s42, 1
        %s190 = smul.addr %s189, 16
        %s191 = scalar_lea.vmem [#allocation2], %s190
        %p192 = pneg %p55
        %p193 = pneg %p52
        %p194 = pneg %p76
        %p195 = pneg %p73
        %p196 = pneg %p97
        %p197 = pneg %p94
        %p198 = pneg %p125
        %p199 = pneg %p122
        %s200 = sand.u32 %s112, 1
        %s201 = scalar_lea.sflag [#allocation4], %s200
        %s202 = sand.u32 %s112, 1
        %s203 = smul.addr %s202, 16
        %s204 = scalar_lea.vmem [#allocation5], %s203
        %s205 = smul.u32 2, %s25
        %s206 = smul.u32 2, %s25
        %v207 = vld [vmem:[%s182] sm:$0xff]
        %v208 = vld [vmem:[%s182 + $0x8] sm:$0xff]
        %v209 = vld [vmem:[%s1] sm:$0xff]
        %v210 = vld [vmem:[%s2] sm:$0xff]
        %212 = vset.pattern.permute.xlu0 0
        %213 = vperm.xlu0 %212, %v210
        %v214 = vpop.permute.xlu0 %213
        %vm216 = vcmask 64512
        %v218 = vsel %vm216, %v209, 0
        %220 = vmatprep.subr.mxu0 0.0
        %221 = vmatpush1.msra.mxu0 0.0
        %222 = vmatprep.subr.mxu0 0.0
        %223 = vmatpush1.msra.mxu0 0.0
        %224 = vmatprep.subr.mxu0 0.0
        %225 = vmatpush1.msra.mxu0 0.0
        %226 = vmatprep.subr.mxu0 0.0
        %227 = vmatpush1.msra.mxu0 0.0
        %228 = vmatprep.subr.mxu0 0.0
        %229 = vmatpush1.msra.mxu0 0.0
        %230 = vmatprep.subr.mxu0 0.0
        %231 = vmatpush1.msra.mxu0 0.0
        %232 = vmatprep.subr.mxu0 0.0
        %233 = vmatpush1.msra.mxu0 0.0
        %234 = vmatprep.subr.mxu0 0.0
        %235 = vmatpush1.msra.mxu0 0.0
        %236 = vmatprep.subr.mxu0 0.0
        %237 = vmatpush1.msra.mxu0 0.0
        %238 = vmatprep.subr.mxu0 0.0
        %239 = vmatpush1.msra.mxu0 0.0
        %240 = vmatprep.subr.mxu0 0.0
        %241 = vmatpush1.msra.mxu0 0.0
        %242 = vmatprep.subr.mxu0 0.0
        %243 = vmatpush1.msra.mxu0 0.0
        %244 = vmatprep.subr.mxu0 0.0
        %245 = vmatpush1.msra.mxu0 0.0
        %246 = vmatprep.subr.mxu0 0.0
        %247 = vmatpush1.msra.mxu0 0.0
        %248 = vmatprep.subr.mxu0 0.0
        %249 = vmatpush1.msra.mxu0 0.0
        %250 = vmatprep.subr.mxu0 %v208
        %251 = vmatpush1.msra.mxu0 %v207
        %252 = vmatprep.subr.mxu0 0.0
        %253 = vmatpush2.msra.mxu0 0.0
        %254 = vmatprep.subr.mxu0 0.0
        %255 = vmatpush2.msra.mxu0 0.0
        %256 = vmatprep.subr.mxu0 0.0
        %257 = vmatpush2.msra.mxu0 0.0
        %258 = vmatprep.subr.mxu0 0.0
        %259 = vmatpush2.msra.mxu0 0.0
        %260 = vmatprep.subr.mxu0 0.0
        %261 = vmatpush2.msra.mxu0 0.0
        %262 = vmatprep.subr.mxu0 0.0
        %263 = vmatpush2.msra.mxu0 0.0
        %264 = vmatprep.subr.mxu0 0.0
        %265 = vmatpush2.msra.mxu0 0.0
        %266 = vmatprep.subr.mxu0 0.0
        %267 = vmatpush2.msra.mxu0 0.0
        %268 = vmatprep.subr.mxu0 0.0
        %269 = vmatpush2.msra.mxu0 0.0
        %270 = vmatprep.subr.mxu0 0.0
        %271 = vmatpush2.msra.mxu0 0.0
        %272 = vmatprep.subr.mxu0 0.0
        %273 = vmatpush2.msra.mxu0 0.0
        %274 = vmatprep.subr.mxu0 0.0
        %275 = vmatpush2.msra.mxu0 0.0
        %276 = vmatprep.subr.mxu0 0.0
        %277 = vmatpush2.msra.mxu0 0.0
        %278 = vmatprep.subr.mxu0 0.0
        %279 = vmatpush2.msra.mxu0 0.0
        %280 = vmatprep.subr.mxu0 0.0
        %281 = vmatpush2.msra.mxu0 0.0
        %282 = vmatprep.subr.mxu0 0.0
        %283 = vmatpush2.msra.mxu0 0.0
        %284 = vmatprep.mubr.f32.mxu0 0.0
        %285 = vmatmul.mubr.f32.gmra.mxu0 %v218
        %v286 = vpop.f32.mrf.mxu0
        %v287 = vadd.f32 %v214, %v286
        %v288 = vpop.f32.mrf.mxu0
        %v289 = vadd.f32 %v214, %v288
        %290 = vdwg.mxu0
        %s291 = scalar_lea.vmem %s1, 8
        %v292 = vld [vmem:[%s291] sm:$0xff]
        %s293 = scalar_lea.vmem %s2, 8
        %v294 = vld [vmem:[%s293] sm:$0xff]
        %296 = vset.pattern.permute.xlu0 0
        %297 = vperm.xlu0 %296, %v294
        %v298 = vpop.permute.xlu0 %297
        %v301 = vsel %vm216, %v292, 0
        %303 = vmatprep.subr.mxu0 0.0
        %304 = vmatpush1.msra.mxu0 0.0
        %305 = vmatprep.subr.mxu0 0.0
        %306 = vmatpush1.msra.mxu0 0.0
        %307 = vmatprep.subr.mxu0 0.0
        %308 = vmatpush1.msra.mxu0 0.0
        %309 = vmatprep.subr.mxu0 0.0
        %310 = vmatpush1.msra.mxu0 0.0
        %311 = vmatprep.subr.mxu0 0.0
        %312 = vmatpush1.msra.mxu0 0.0
        %313 = vmatprep.subr.mxu0 0.0
        %314 = vmatpush1.msra.mxu0 0.0
        %315 = vmatprep.subr.mxu0 0.0
        %316 = vmatpush1.msra.mxu0 0.0
        %317 = vmatprep.subr.mxu0 0.0
        %318 = vmatpush1.msra.mxu0 0.0
        %319 = vmatprep.subr.mxu0 0.0
        %320 = vmatpush1.msra.mxu0 0.0
        %321 = vmatprep.subr.mxu0 0.0
        %322 = vmatpush1.msra.mxu0 0.0
        %323 = vmatprep.subr.mxu0 0.0
        %324 = vmatpush1.msra.mxu0 0.0
        %325 = vmatprep.subr.mxu0 0.0
        %326 = vmatpush1.msra.mxu0 0.0
        %327 = vmatprep.subr.mxu0 0.0
        %328 = vmatpush1.msra.mxu0 0.0
        %329 = vmatprep.subr.mxu0 0.0
        %330 = vmatpush1.msra.mxu0 0.0
        %331 = vmatprep.subr.mxu0 0.0
        %332 = vmatpush1.msra.mxu0 0.0
        %333 = vmatprep.subr.mxu0 %v289
        %334 = vmatpush1.msra.mxu0 %v287
        %335 = vmatprep.subr.mxu0 0.0
        %336 = vmatpush2.msra.mxu0 0.0
        %337 = vmatprep.subr.mxu0 0.0
        %338 = vmatpush2.msra.mxu0 0.0
        %339 = vmatprep.subr.mxu0 0.0
        %340 = vmatpush2.msra.mxu0 0.0
        %341 = vmatprep.subr.mxu0 0.0
        %342 = vmatpush2.msra.mxu0 0.0
        %343 = vmatprep.subr.mxu0 0.0
        %344 = vmatpush2.msra.mxu0 0.0
        %345 = vmatprep.subr.mxu0 0.0
        %346 = vmatpush2.msra.mxu0 0.0
        %347 = vmatprep.subr.mxu0 0.0
        %348 = vmatpush2.msra.mxu0 0.0
        %349 = vmatprep.subr.mxu0 0.0
        %350 = vmatpush2.msra.mxu0 0.0
        %351 = vmatprep.subr.mxu0 0.0
        %352 = vmatpush2.msra.mxu0 0.0
        %353 = vmatprep.subr.mxu0 0.0
        %354 = vmatpush2.msra.mxu0 0.0
        %355 = vmatprep.subr.mxu0 0.0
        %356 = vmatpush2.msra.mxu0 0.0
        %357 = vmatprep.subr.mxu0 0.0
        %358 = vmatpush2.msra.mxu0 0.0
        %359 = vmatprep.subr.mxu0 0.0
        %360 = vmatpush2.msra.mxu0 0.0
        %361 = vmatprep.subr.mxu0 0.0
        %362 = vmatpush2.msra.mxu0 0.0
        %363 = vmatprep.subr.mxu0 0.0
        %364 = vmatpush2.msra.mxu0 0.0
        %365 = vmatprep.subr.mxu0 0.0
        %366 = vmatpush2.msra.mxu0 0.0
        %367 = vmatprep.mubr.f32.mxu0 0.0
        %368 = vmatmul.mubr.f32.gmra.mxu0 %v301
        %v369 = vpop.f32.mrf.mxu0
        %v370 = vadd.f32 %v298, %v369
        %v371 = vpop.f32.mrf.mxu0
        %v372 = vadd.f32 %v298, %v371
        %373 = vdwg.mxu0
        %s374 = scalar_lea.vmem %s1, 16
        %v375 = vld [vmem:[%s374] sm:$0xff]
        %s376 = scalar_lea.vmem %s2, 16
        %v377 = vld [vmem:[%s376] sm:$0xff]
        %379 = vset.pattern.permute.xlu0 0
        %380 = vperm.xlu0 %379, %v377
        %v381 = vpop.permute.xlu0 %380
        %v384 = vsel %vm216, %v375, 0
        %386 = vmatprep.subr.mxu0 0.0
        %387 = vmatpush1.msra.mxu0 0.0
        %388 = vmatprep.subr.mxu0 0.0
        %389 = vmatpush1.msra.mxu0 0.0
        %390 = vmatprep.subr.mxu0 0.0
        %391 = vmatpush1.msra.mxu0 0.0
        %392 = vmatprep.subr.mxu0 0.0
        %393 = vmatpush1.msra.mxu0 0.0
        %394 = vmatprep.subr.mxu0 0.0
        %395 = vmatpush1.msra.mxu0 0.0
        %396 = vmatprep.subr.mxu0 0.0
        %397 = vmatpush1.msra.mxu0 0.0
        %398 = vmatprep.subr.mxu0 0.0
        %399 = vmatpush1.msra.mxu0 0.0
        %400 = vmatprep.subr.mxu0 0.0
        %401 = vmatpush1.msra.mxu0 0.0
        %402 = vmatprep.subr.mxu0 0.0
        %403 = vmatpush1.msra.mxu0 0.0
        %404 = vmatprep.subr.mxu0 0.0
        %405 = vmatpush1.msra.mxu0 0.0
        %406 = vmatprep.subr.mxu0 0.0
        %407 = vmatpush1.msra.mxu0 0.0
        %408 = vmatprep.subr.mxu0 0.0
        %409 = vmatpush1.msra.mxu0 0.0
        %410 = vmatprep.subr.mxu0 0.0
        %411 = vmatpush1.msra.mxu0 0.0
        %412 = vmatprep.subr.mxu0 0.0
        %413 = vmatpush1.msra.mxu0 0.0
        %414 = vmatprep.subr.mxu0 0.0
        %415 = vmatpush1.msra.mxu0 0.0
        %416 = vmatprep.subr.mxu0 %v372
        %417 = vmatpush1.msra.mxu0 %v370
        %418 = vmatprep.subr.mxu0 0.0
        %419 = vmatpush2.msra.mxu0 0.0
        %420 = vmatprep.subr.mxu0 0.0
        %421 = vmatpush2.msra.mxu0 0.0
        %422 = vmatprep.subr.mxu0 0.0
        %423 = vmatpush2.msra.mxu0 0.0
        %424 = vmatprep.subr.mxu0 0.0
        %425 = vmatpush2.msra.mxu0 0.0
        %426 = vmatprep.subr.mxu0 0.0
        %427 = vmatpush2.msra.mxu0 0.0
        %428 = vmatprep.subr.mxu0 0.0
        %429 = vmatpush2.msra.mxu0 0.0
        %430 = vmatprep.subr.mxu0 0.0
        %431 = vmatpush2.msra.mxu0 0.0
        %432 = vmatprep.subr.mxu0 0.0
        %433 = vmatpush2.msra.mxu0 0.0
        %434 = vmatprep.subr.mxu0 0.0
        %435 = vmatpush2.msra.mxu0 0.0
        %436 = vmatprep.subr.mxu0 0.0
        %437 = vmatpush2.msra.mxu0 0.0
        %438 = vmatprep.subr.mxu0 0.0
        %439 = vmatpush2.msra.mxu0 0.0
        %440 = vmatprep.subr.mxu0 0.0
        %441 = vmatpush2.msra.mxu0 0.0
        %442 = vmatprep.subr.mxu0 0.0
        %443 = vmatpush2.msra.mxu0 0.0
        %444 = vmatprep.subr.mxu0 0.0
        %445 = vmatpush2.msra.mxu0 0.0
        %446 = vmatprep.subr.mxu0 0.0
        %447 = vmatpush2.msra.mxu0 0.0
        %448 = vmatprep.subr.mxu0 0.0
        %449 = vmatpush2.msra.mxu0 0.0
        %450 = vmatprep.mubr.f32.mxu0 0.0
        %451 = vmatmul.mubr.f32.gmra.mxu0 %v384
        %v452 = vpop.f32.mrf.mxu0
        %v453 = vadd.f32 %v381, %v452
        %v454 = vpop.f32.mrf.mxu0
        %v455 = vadd.f32 %v381, %v454
        %456 = vdwg.mxu0
        %457 = vst [vmem:[%s204] sm:$0xff] %v453
        %458 = vst [vmem:[%s204 + $0x8] sm:$0xff] %v455
        %s459 = sand.u32 %s112, 1
        %s460 = scalar_lea.sflag [#allocation4], %s459
        %s461 = sand.u32 %s112, 1
        %s462 = smul.addr %s461, 16
        %s463 = scalar_lea.vmem [#allocation5], %s462
        // Predicated region
        $region37: #{tpu_custom_call.1} parent=31 // pred_check
          %p464 = pneg %p122
        $region38: #{tpu_custom_call.1} parent=31 // pred_check_branch
          %466 = sbr.rel (%p464) target = $region40
        $region39: #{tpu_custom_call.1} parent=31 // pred_region
          %s467 = smul.u32 2, %s25
          %s469 = ssub.s32 256, 256
          %470 = vsyncadd %s460, %s469
          %s471 = smul.addr %s24, 2
          %s472 = sadd.s32 %s467, %s471
          %s473 = smul.addr %s472, 128
          %s474 = scalar_lea.hbm %s3, %s473
          %s476 = sshll.u32 %s463, 4
          %s477 = int_to_ptr.vmem [resolvable:$true] %s476
          %479 = dma.vmem_to_hbm [thread:$0]  %s477, 256, %s474, %s460
        $region40: #{tpu_custom_call.1} parent=31 // pred_fallthru
          _
      $region32: #{tpu_custom_call.1} parent=5 // pred_fallthru
        _
      %p480 = scmp.le.s32.totalorder 2, %s15
      // Predicated region
      $region41: #{tpu_custom_call.1} parent=5 // pred_check
        %p481 = pneg %p480
      $region42: #{tpu_custom_call.1} parent=5 // pred_check_branch
        %483 = sbr.rel (%p481) target = $region44
      $region43: #{tpu_custom_call.1} parent=5 // pred_region
        %s484 = ssub.s32 %s15, 2
        // Predicated region
        $region45: #{tpu_custom_call.1} parent=43 // pred_check
          %p485 = pneg %p128
        $region46: #{tpu_custom_call.1} parent=43 // pred_check_branch
          %487 = sbr.rel (%p485) target = $region48
        $region47: #{tpu_custom_call.1} parent=43 // pred_region
          %s488 = sand.u32 %s113, 1
          %s489 = scalar_lea.sflag [#allocation4], %s488
          %s490 = sand.u32 %s113, 1
          %s491 = smul.addr %s490, 16
          %s492 = scalar_lea.vmem [#allocation5], %s491
          %493 = dma.done %s489, 256
        $region48: #{tpu_custom_call.1} parent=43 // pred_fallthru
          _
      $region44: #{tpu_custom_call.1} parent=5 // pred_fallthru
        _
    $region6: #{tpu_custom_call.1} parent=1 // loop_footer
      %s19 = sadd.s32 1, %s15
    $region7: #{tpu_custom_call.1} parent=1 // loop_footer_branch
      %14 = sbr.rel target = $region3
    $region8: #{tpu_custom_call.1} parent=1 // loop_exit
      _
    %494 = vsyncpa [#allocation3], 1
    %s495 = scalar_lea.sflag [#allocation3], 1
    %496 = vsyncpa %s495, 1
    %497 = vsyncpa [#allocation4], 1
    %s498 = scalar_lea.sflag [#allocation4], 1
    %499 = vsyncpa %s498, 1

</llo_original>
